<compile_context>
chip_gen: v7x
topology: tpu7x:2x2x1
jax: 0.10.0
libtpu: 0.0.40
codegen_flags: <defaults>
</compile_context>

<pallas_src>
import jax
import jax.numpy as jnp
from jax import lax
from jax.experimental import pallas as pl
from jax.experimental.pallas import tpu as pltpu

IN_DIM = 3
HIDDEN = 512
OUT_CH = 64
OUT_HW = 10               # conv output spatial size: (1 + 2*5 - 2) + 1 = 10
OUT_SP = OUT_HW * OUT_HW  # 100
N_TAPS = 4                # 2x2 kernel -> 4 taps


def target_encoding_kernel(t_ref, w_ref, b_ref, bc_ref, o_ref):
    """t: (B,3); w: (3,256) folded weight (col = tap*64 + out_ch, taps ordered so they
    map to flattened pixels 44,45,54,55); b: (1,256) folded bias (conv bias included);
    bc: (1,64) conv bias; o: (B, 100, 64)."""
    B = t_ref.shape[0]

    # Single fused MXU matmul: Linear + all 4 conv taps folded into (3, 4*64).
    y = jnp.dot(t_ref[...], w_ref[...],
                preferred_element_type=jnp.float32) + b_ref[...]            # (B, 256)

    # Every output pixel the single (padded) input pixel cannot reach is just conv bias.
    o_ref[...] = jnp.broadcast_to(bc_ref[...][:, None, :], (B, OUT_SP, OUT_CH))

    # The 4 reachable pixels: contiguous 64-lane slices of y, stored directly.
    o_ref[:, 44, :] = y[:, 0 * OUT_CH:1 * OUT_CH]   # tap (kh,kw)=(1,1) -> pixel (4,4)
    o_ref[:, 45, :] = y[:, 1 * OUT_CH:2 * OUT_CH]   # tap (1,0)        -> pixel (4,5)
    o_ref[:, 54, :] = y[:, 2 * OUT_CH:3 * OUT_CH]   # tap (0,1)        -> pixel (5,4)
    o_ref[:, 55, :] = y[:, 3 * OUT_CH:4 * OUT_CH]   # tap (0,0)        -> pixel (5,5)


def target_encoding(target, w_lin, b_lin, w_conv, b_conv,
                    patch_size, embed_channels=1):
    """target: (B,3). w_lin: (512,3) torch layout. b_lin: (512,).
    w_conv: (64,512,2,2) torch OIHW. b_conv: (64,)."""
    B = target.shape[0]
    h, w = patch_size

    # ---- Fold Linear into the (1x1-input) conv, outside the kernel (XLA const-folds
    # this under jit when weights are static). Tap order -> pixels 44, 45, 54, 55. ----
    taps = [w_conv[:, :, 1, 1], w_conv[:, :, 1, 0],
            w_conv[:, :, 0, 1], w_conv[:, :, 0, 0]]                 # each (64, 512)
    wc_fused = jnp.concatenate([t.T for t in taps], axis=1)         # (512, 256)
    w_comb = jnp.dot(jnp.transpose(w_lin), wc_fused,
                     precision=lax.Precision.HIGHEST)               # (3, 256)
    b_comb = (jnp.dot(b_lin, wc_fused, precision=lax.Precision.HIGHEST)
              + jnp.tile(b_conv, N_TAPS)).reshape(1, N_TAPS * OUT_CH)  # (1, 256)

    in_bytes = (B * IN_DIM + IN_DIM * N_TAPS * OUT_CH
                + N_TAPS * OUT_CH + OUT_CH) * 4
    out_bytes = B * OUT_SP * OUT_CH * 4

    out = pl.pallas_call(
        target_encoding_kernel,
        out_shape=jax.ShapeDtypeStruct((B, OUT_SP, OUT_CH), jnp.float32),
        in_specs=[pl.BlockSpec(memory_space=pltpu.MemorySpace.VMEM)] * 4,
        out_specs=pl.BlockSpec(memory_space=pltpu.MemorySpace.VMEM),
        cost_estimate=pl.CostEstimate(flops=2 * B * IN_DIM * N_TAPS * OUT_CH,
                                      transcendentals=0,
                                      bytes_accessed=in_bytes + out_bytes),
    )(target, w_comb, b_comb, b_conv.reshape(1, OUT_CH))

    # (B, 100, 64) -> NCHW-flattened (B, 64, 100) -> torch .view(B, C, h, w).
    return jnp.transpose(out, (0, 2, 1)).reshape(B, embed_channels, h, w)


def reference(target, w_lin, b_lin, w_conv, b_conv, patch_size, embed_channels=1):
    """Pure-JAX reference mirroring the torch forward exactly."""
    B = target.shape[0]
    hidden = target @ w_lin.T + b_lin                                   # (B, 512)
    x = hidden[:, :, None, None]                                        # (B, 512, 1, 1)
    y = lax.conv_general_dilated(
        x, w_conv, window_strides=(1, 1), padding=[(5, 5), (5, 5)],
        dimension_numbers=('NCHW', 'OIHW', 'NCHW'),
        precision=lax.Precision.HIGHEST)
    y = y + b_conv[None, :, None, None]
    return y.reshape(B, embed_channels, *patch_size)


if __name__ == "__main__":
    # conv output is always (B, 64, 10, 10) = 6400 elements/batch, so the torch
    # .view requires embed_channels * h * w == 6400.
    embed_channels = 1
    patch_size = (80, 80)
    B = 2

    key = jax.random.PRNGKey(0)
    k_t, k_wl, k_bl, k_wc, k_bc = jax.random.split(key, 5)

    target = jax.random.normal(k_t, (B, IN_DIM), dtype=jnp.float32)

    # Deterministic parameter init (torch-like uniform fan-in bounds).
    lin_bound = 1.0 / (IN_DIM ** 0.5)
    w_lin = jax.random.uniform(k_wl, (HIDDEN, IN_DIM), jnp.float32,
                               -lin_bound, lin_bound)
    b_lin = jax.random.uniform(k_bl, (HIDDEN,), jnp.float32,
                               -lin_bound, lin_bound)
    conv_bound = 1.0 / ((HIDDEN * 2 * 2) ** 0.5)
    w_conv = jax.random.uniform(k_wc, (OUT_CH, HIDDEN, 2, 2), jnp.float32,
                                -conv_bound, conv_bound)
    b_conv = jax.random.uniform(k_bc, (OUT_CH,), jnp.float32,
                                -conv_bound, conv_bound)

    out = target_encoding(target, w_lin, b_lin, w_conv, b_conv,
                          patch_size, embed_channels)
    out = jax.block_until_ready(out)

    ref = reference(target, w_lin, b_lin, w_conv, b_conv,
                    patch_size, embed_channels)

    assert out.shape == (B, embed_channels, *patch_size), out.shape
    assert jnp.allclose(out, ref, atol=1e-3, rtol=1e-3), \
        float(jnp.max(jnp.abs(out - ref)))

    print("KERNEL_OK")
</pallas_src>

<mosaic_0001>
module attributes {stable_mosaic.version = 11 : i64} {
  func.func @target_encoding_kernel(%arg0: memref<2x3xf32, #tpu.memory_space<vmem>>, %arg1: memref<3x256xf32, #tpu.memory_space<vmem>>, %arg2: memref<1x256xf32, #tpu.memory_space<vmem>>, %arg3: memref<1x64xf32, #tpu.memory_space<vmem>>, %arg4: memref<2x100x64xf32, #tpu.memory_space<vmem>>) attributes {dimension_semantics = [], scalar_prefetch = 0 : i64, scratch_operands = 0 : i64, tpu.core_type = #tpu.core_type<tc>} {
    %c0 = arith.constant 0 : index
    %c0_0 = arith.constant 0 : index
    %0 = vector.load %arg0[%c0, %c0_0] : memref<2x3xf32, #tpu.memory_space<vmem>>, vector<2x3xf32>
    %c0_1 = arith.constant 0 : index
    %c0_2 = arith.constant 0 : index
    %1 = vector.load %arg1[%c0_1, %c0_2] : memref<3x256xf32, #tpu.memory_space<vmem>>, vector<3x256xf32>
    %cst = arith.constant dense<0.000000e+00> : vector<2x256xf32>
    %2 = tpu.matmul %0, %1, %cst {dimension_numbers = #tpu.dot_dimension_numbers<[1], [0], [0], [1], [0, 0, 1, 1], [], []>} : vector<2x3xf32>, vector<3x256xf32>, vector<2x256xf32> -> vector<2x256xf32>
    %c0_3 = arith.constant 0 : index
    %c0_4 = arith.constant 0 : index
    %3 = vector.load %arg2[%c0_3, %c0_4] : memref<1x256xf32, #tpu.memory_space<vmem>>, vector<1x256xf32>
    %4 = vector.broadcast %3 : vector<1x256xf32> to vector<2x256xf32>
    %5 = arith.addf %2, %4 : vector<2x256xf32>
    %c0_5 = arith.constant 0 : index
    %c0_6 = arith.constant 0 : index
    %6 = vector.load %arg3[%c0_5, %c0_6] : memref<1x64xf32, #tpu.memory_space<vmem>>, vector<1x64xf32>
    %7 = vector.shape_cast %6 : vector<1x64xf32> to vector<1x1x64xf32>
    %8 = vector.shape_cast %7 : vector<1x1x64xf32> to vector<1x1x64xf32>
    %9 = vector.broadcast %8 : vector<1x1x64xf32> to vector<2x100x64xf32>
    %c0_7 = arith.constant 0 : index
    %c0_8 = arith.constant 0 : index
    %c0_9 = arith.constant 0 : index
    %10 = vector.load %arg4[%c0_7, %c0_8, %c0_9] : memref<2x100x64xf32, #tpu.memory_space<vmem>>, vector<2x100x64xf32>
    tpu.vector_store %arg4[%c0_7, %c0_8, %c0_9], %9 {strides = array<i32>} : memref<2x100x64xf32, #tpu.memory_space<vmem>>, vector<2x100x64xf32>,
    %11 = vector.extract_strided_slice %5 {offsets = [0, 0], sizes = [2, 64], strides = [1, 1]} : vector<2x256xf32> to vector<2x64xf32>
    %c0_10 = arith.constant 0 : index
    %c44 = arith.constant 44 : index
    %c0_11 = arith.constant 0 : index
    %12 = vector.load %arg4[%c0_10, %c44, %c0_11] : memref<2x100x64xf32, #tpu.memory_space<vmem>>, vector<2x1x64xf32>
    %13 = vector.shape_cast %12 : vector<2x1x64xf32> to vector<2x64xf32>
    %14 = vector.shape_cast %11 : vector<2x64xf32> to vector<2x1x64xf32>
    tpu.vector_store %arg4[%c0_10, %c44, %c0_11], %14 {strides = array<i32>} : memref<2x100x64xf32, #tpu.memory_space<vmem>>, vector<2x1x64xf32>,
    %15 = vector.extract_strided_slice %5 {offsets = [0, 64], sizes = [2, 64], strides = [1, 1]} : vector<2x256xf32> to vector<2x64xf32>
    %c0_12 = arith.constant 0 : index
    %c45 = arith.constant 45 : index
    %c0_13 = arith.constant 0 : index
    %16 = vector.load %arg4[%c0_12, %c45, %c0_13] : memref<2x100x64xf32, #tpu.memory_space<vmem>>, vector<2x1x64xf32>
    %17 = vector.shape_cast %16 : vector<2x1x64xf32> to vector<2x64xf32>
    %18 = vector.shape_cast %15 : vector<2x64xf32> to vector<2x1x64xf32>
    tpu.vector_store %arg4[%c0_12, %c45, %c0_13], %18 {strides = array<i32>} : memref<2x100x64xf32, #tpu.memory_space<vmem>>, vector<2x1x64xf32>,
    %19 = vector.extract_strided_slice %5 {offsets = [0, 128], sizes = [2, 64], strides = [1, 1]} : vector<2x256xf32> to vector<2x64xf32>
    %c0_14 = arith.constant 0 : index
    %c54 = arith.constant 54 : index
    %c0_15 = arith.constant 0 : index
    %20 = vector.load %arg4[%c0_14, %c54, %c0_15] : memref<2x100x64xf32, #tpu.memory_space<vmem>>, vector<2x1x64xf32>
    %21 = vector.shape_cast %20 : vector<2x1x64xf32> to vector<2x64xf32>
    %22 = vector.shape_cast %19 : vector<2x64xf32> to vector<2x1x64xf32>
    tpu.vector_store %arg4[%c0_14, %c54, %c0_15], %22 {strides = array<i32>} : memref<2x100x64xf32, #tpu.memory_space<vmem>>, vector<2x1x64xf32>,
    %23 = vector.extract_strided_slice %5 {offsets = [0, 192], sizes = [2, 64], strides = [1, 1]} : vector<2x256xf32> to vector<2x64xf32>
    %c0_16 = arith.constant 0 : index
    %c55 = arith.constant 55 : index
    %c0_17 = arith.constant 0 : index
    %24 = vector.load %arg4[%c0_16, %c55, %c0_17] : memref<2x100x64xf32, #tpu.memory_space<vmem>>, vector<2x1x64xf32>
    %25 = vector.shape_cast %24 : vector<2x1x64xf32> to vector<2x64xf32>
    %26 = vector.shape_cast %23 : vector<2x64xf32> to vector<2x1x64xf32>
    tpu.vector_store %arg4[%c0_16, %c55, %c0_17], %26 {strides = array<i32>} : memref<2x100x64xf32, #tpu.memory_space<vmem>>, vector<2x1x64xf32>,
    return
  }
}

</mosaic_0001>

<llo_original>
// kernel: tpu_custom_call.1
$region0: #{tpu_custom_call.1}
  #allocation0 [shape = 'u32[]', space=smem, size = 0x4, offset = 0x4, fixed_abs, tag = 'smem constant byte address 0x4 - core index']
  #allocation1 [shape = 'u32[144,128]{1,0:T(1,128)}', space=vmem, size = 0x12000, scoped, tag = 'internal scratch']
  %s0 = inlined_call_operand.hbm [shape: f32[2,3], index: 0, kind: input, shape index: {}]
  %s1 = inlined_call_operand.hbm [shape: f32[3,256], index: 1, kind: input, shape index: {}]
  %s2 = inlined_call_operand.vmem [shape: f32[1,256], index: 2, kind: input, shape index: {}]
  %s3 = inlined_call_operand.vmem [shape: f32[1,64], index: 3, kind: input, shape index: {}]
  %s4 = inlined_call_operand.vmem [shape: f32[2,100,64], index: 4, kind: output, shape index: {}]
  %s5 = sld [smem:[#allocation0]]
  $region34: #{tpu_custom_call.1} parent=0
    _
  %s7 = ssub.s32 1, %s5
  %s8 = scalar_select 0, %s7, %s5
  $region1: #{tpu_custom_call.1} parent=0
    #allocation2 [shape = 'u8[1024]{0}', space=vmem, size = 0x400, scoped, tag = 'input window, operand 0, single buffered']
    #allocation3 [shape = 's32[1]{0}', space=sflag, size = 0x4, scoped, tag = 'scoped memory for tpu_custom_call.1']
    #allocation4 [shape = 'u8[4096]{0}', space=vmem, size = 0x1000, scoped, tag = 'input window, operand 1, single buffered']
    #allocation5 [shape = 's32[1]{0}', space=sflag, size = 0x4, scoped, tag = 'scoped memory for tpu_custom_call.1']
    %9 = vsyncpa [#allocation3], 0
    %10 = vsyncpa [#allocation5], 0
    // Predicated region
    $region2: #{tpu_custom_call.1} parent=1 // pred_check
      _
    $region3: #{tpu_custom_call.1} parent=1 // pred_check_branch
      %12 = sbr.rel (0) target = $region5
    $region4: #{tpu_custom_call.1} parent=1 // pred_region
      %s14 = ssub.s32 32, 32
      %15 = vsyncadd [#allocation3], %s14
      %s17 = sshll.u32 [#allocation2], 4
      %s18 = int_to_ptr.vmem [resolvable:$true] %s17
      %20 = dma.hbm_to_vmem [thread:$0]  %s0, 32, %s18, [#allocation3]
    $region5: #{tpu_custom_call.1} parent=1 // pred_fallthru
      _
    // Predicated region
    $region6: #{tpu_custom_call.1} parent=1 // pred_check
      _
    $region7: #{tpu_custom_call.1} parent=1 // pred_check_branch
      %22 = sbr.rel (0) target = $region9
    $region8: #{tpu_custom_call.1} parent=1 // pred_region
      %s24 = ssub.s32 128, 128
      %25 = vsyncadd [#allocation5], %s24
      %s27 = sshll.u32 [#allocation4], 4
      %s28 = int_to_ptr.vmem [resolvable:$true] %s27
      %30 = dma.hbm_to_vmem [thread:$0]  %s1, 128, %s28, [#allocation5]
    $region9: #{tpu_custom_call.1} parent=1 // pred_fallthru
      _
    // Predicated region
    $region10: #{tpu_custom_call.1} parent=1 // pred_check
      _
    $region11: #{tpu_custom_call.1} parent=1 // pred_check_branch
      %32 = sbr.rel (0) target = $region13
    $region12: #{tpu_custom_call.1} parent=1 // pred_region
      _
    $region13: #{tpu_custom_call.1} parent=1 // pred_fallthru
      _
    // Predicated region
    $region14: #{tpu_custom_call.1} parent=1 // pred_check
      _
    $region15: #{tpu_custom_call.1} parent=1 // pred_check_branch
      %34 = sbr.rel (0) target = $region17
    $region16: #{tpu_custom_call.1} parent=1 // pred_region
      _
    $region17: #{tpu_custom_call.1} parent=1 // pred_fallthru
      _
    // Predicated region
    $region18: #{tpu_custom_call.1} parent=1 // pred_check
      _
    $region19: #{tpu_custom_call.1} parent=1 // pred_check_branch
      %36 = sbr.rel (0) target = $region21
    $region20: #{tpu_custom_call.1} parent=1 // pred_region
      %37 = dma.done [#allocation3], 32
    $region21: #{tpu_custom_call.1} parent=1 // pred_fallthru
      _
    // Predicated region
    $region22: #{tpu_custom_call.1} parent=1 // pred_check
      _
    $region23: #{tpu_custom_call.1} parent=1 // pred_check_branch
      %39 = sbr.rel (0) target = $region25
    $region24: #{tpu_custom_call.1} parent=1 // pred_region
      %40 = dma.done [#allocation5], 128
    $region25: #{tpu_custom_call.1} parent=1 // pred_fallthru
      _
    %v41 = vld [vmem:[#allocation2] sm:$0x3]
    %v42 = vld [vmem:[#allocation4] sm:$0x77]
    %v43 = vld [vmem:[%s2] sm:$0x3]
    %v45 = vlaneseq
    %v46 = vshrl.u32 %v45, 7
    %v47 = vsub.s32 0, %v46
    %v48 = vrot.slane %v43, %v47
    %v49 = vlaneseq
    %v50 = vshrl.u32 %v49, 7
    %v51 = vsub.s32 1, %v50
    %v52 = vrot.slane %v43, %v51
    %v56 = vcombine.high %v42, %v42
    %vm57 = vcmask 23552
    %v59 = vsel %vm57, %v41, 0
    %vm61 = vcmask 1042432
    %v62 = vsel %vm61, %v42, 0
    %v64 = vsel %vm61, %v56, 0
    %66 = vmatprep.subr.mxu0 %v64
    %67 = vmatpush1.msra.mxu0 %v62
    %68 = vmatprep.subr.mxu0 0.0
    %69 = vmatpush1.msra.mxu0 0.0
    %70 = vmatprep.subr.mxu0 0.0
    %71 = vmatpush1.msra.mxu0 0.0
    %72 = vmatprep.subr.mxu0 0.0
    %73 = vmatpush1.msra.mxu0 0.0
    %74 = vmatprep.subr.mxu0 0.0
    %75 = vmatpush1.msra.mxu0 0.0
    %76 = vmatprep.subr.mxu0 0.0
    %77 = vmatpush1.msra.mxu0 0.0
    %78 = vmatprep.subr.mxu0 0.0
    %79 = vmatpush1.msra.mxu0 0.0
    %80 = vmatprep.subr.mxu0 0.0
    %81 = vmatpush1.msra.mxu0 0.0
    %82 = vmatprep.subr.mxu0 0.0
    %83 = vmatpush1.msra.mxu0 0.0
    %84 = vmatprep.subr.mxu0 0.0
    %85 = vmatpush1.msra.mxu0 0.0
    %86 = vmatprep.subr.mxu0 0.0
    %87 = vmatpush1.msra.mxu0 0.0
    %88 = vmatprep.subr.mxu0 0.0
    %89 = vmatpush1.msra.mxu0 0.0
    %90 = vmatprep.subr.mxu0 0.0
    %91 = vmatpush1.msra.mxu0 0.0
    %92 = vmatprep.subr.mxu0 0.0
    %93 = vmatpush1.msra.mxu0 0.0
    %94 = vmatprep.subr.mxu0 0.0
    %95 = vmatpush1.msra.mxu0 0.0
    %96 = vmatprep.subr.mxu0 0.0
    %97 = vmatpush1.msra.mxu0 0.0
    %98 = vmatprep.subr.mxu0 0.0
    %99 = vmatpush1.msra.mxu0 0.0
    %100 = vmatprep.subr.mxu0 0.0
    %101 = vmatpush1.msra.mxu0 0.0
    %102 = vmatprep.subr.mxu0 0.0
    %103 = vmatpush1.msra.mxu0 0.0
    %104 = vmatprep.subr.mxu0 0.0
    %105 = vmatpush1.msra.mxu0 0.0
    %106 = vmatprep.subr.mxu0 0.0
    %107 = vmatpush1.msra.mxu0 0.0
    %108 = vmatprep.subr.mxu0 0.0
    %109 = vmatpush1.msra.mxu0 0.0
    %110 = vmatprep.subr.mxu0 0.0
    %111 = vmatpush1.msra.mxu0 0.0
    %112 = vmatprep.subr.mxu0 0.0
    %113 = vmatpush1.msra.mxu0 0.0
    %114 = vmatprep.subr.mxu0 0.0
    %115 = vmatpush1.msra.mxu0 0.0
    %116 = vmatprep.subr.mxu0 0.0
    %117 = vmatpush1.msra.mxu0 0.0
    %118 = vmatprep.subr.mxu0 0.0
    %119 = vmatpush1.msra.mxu0 0.0
    %120 = vmatprep.subr.mxu0 0.0
    %121 = vmatpush1.msra.mxu0 0.0
    %122 = vmatprep.subr.mxu0 0.0
    %123 = vmatpush1.msra.mxu0 0.0
    %124 = vmatprep.subr.mxu0 0.0
    %125 = vmatpush1.msra.mxu0 0.0
    %126 = vmatprep.subr.mxu0 0.0
    %127 = vmatpush1.msra.mxu0 0.0
    %128 = vmatprep.subr.mxu0 0.0
    %129 = vmatpush1.msra.mxu0 0.0
    %130 = vmatprep.mubr.f32.mxu0 0.0
    %131 = vmatmul.mubr.f32.gmra.mrb[0].mxu0 %v59
    %v132 = vpop.f32.mrb[0].mxu0
    %v133 = vadd.f32 %v48, %v132
    %v134 = vpop.f32.mrb[0].mxu0
    %v135 = vadd.f32 %v52, %v134
    %136 = vdwg.mxu0
    %v137 = vld [vmem:[%s3] sm:$0x1]
    %v139 = vlaneseq
    %v140 = vshrl.u32 %v139, 7
    %v141 = vsub.s32 0, %v140
    %v142 = vrot.slane %v137, %v141
    %vm144 = vcmask 523264
    %145 = vst.msk [vmem:[%s4] sm:$0xff] %vm144, %v142
    %146 = vst.msk [vmem:[%s4 + $0x8] sm:$0xff] %vm144, %v142
    %147 = vst.msk [vmem:[%s4 + $0x10] sm:$0xff] %vm144, %v142
    %148 = vst.msk [vmem:[%s4 + $0x18] sm:$0xff] %vm144, %v142
    %149 = vst.msk [vmem:[%s4 + $0x20] sm:$0xff] %vm144, %v142
    %150 = vst.msk [vmem:[%s4 + $0x28] sm:$0xff] %vm144, %v142
    %151 = vst.msk [vmem:[%s4 + $0x30] sm:$0xff] %vm144, %v142
    %152 = vst.msk [vmem:[%s4 + $0x38] sm:$0xff] %vm144, %v142
    %153 = vst.msk [vmem:[%s4 + $0x40] sm:$0xff] %vm144, %v142
    %154 = vst.msk [vmem:[%s4 + $0x48] sm:$0xff] %vm144, %v142
    %155 = vst.msk [vmem:[%s4 + $0x50] sm:$0xff] %vm144, %v142
    %156 = vst.msk [vmem:[%s4 + $0x58] sm:$0xff] %vm144, %v142
    %vm157 = vcmask 519168
    %158 = vst.msk [vmem:[%s4 + $0x60] sm:$0xf] %vm157, %v142
    %159 = vst.msk [vmem:[%s4 + $0x68] sm:$0xff] %vm144, %v142
    %160 = vst.msk [vmem:[%s4 + $0x70] sm:$0xff] %vm144, %v142
    %161 = vst.msk [vmem:[%s4 + $0x78] sm:$0xff] %vm144, %v142
    %162 = vst.msk [vmem:[%s4 + $0x80] sm:$0xff] %vm144, %v142
    %163 = vst.msk [vmem:[%s4 + $0x88] sm:$0xff] %vm144, %v142
    %164 = vst.msk [vmem:[%s4 + $0x90] sm:$0xff] %vm144, %v142
    %165 = vst.msk [vmem:[%s4 + $0x98] sm:$0xff] %vm144, %v142
    %166 = vst.msk [vmem:[%s4 + $0xa0] sm:$0xff] %vm144, %v142
    %167 = vst.msk [vmem:[%s4 + $0xa8] sm:$0xff] %vm144, %v142
    %168 = vst.msk [vmem:[%s4 + $0xb0] sm:$0xff] %vm144, %v142
    %169 = vst.msk [vmem:[%s4 + $0xb8] sm:$0xff] %vm144, %v142
    %170 = vst.msk [vmem:[%s4 + $0xc0] sm:$0xff] %vm144, %v142
    %171 = vst.msk [vmem:[%s4 + $0xc8] sm:$0xf] %vm157, %v142
    %v174 = vunpack.c.l.s4 1966171168
    %v175 = vunpack.c.0.s8 %v174
    %v176 = vlaneseq
    %v177 = vshrl.u32 %v176, 7
    %v178 = vsub.s32 %v175, %v177
    %v179 = vrot.slane %v133, %v178
    %v180 = vcombine.high %v179, %v179
    %v182 = vunpack.c.l.s4 1966171168
    %v183 = vunpack.c.0.s8 %v182
    %v184 = vlaneseq
    %v185 = vshrl.u32 %v184, 7
    %v186 = vsub.s32 %v183, %v185
    %v187 = vrot.slane %v179, %v186
    %v189 = vunpack.c.l.s4 1966171168
    %v190 = vunpack.c.0.s8 %v189
    %v191 = vlaneseq
    %v192 = vshrl.u32 %v191, 7
    %v193 = vsub.s32 %v190, %v192
    %v194 = vrot.slane %v180, %v193
    %vm197 = vcmask 516096
    %198 = vst.msk [vmem:[%s4 + $0x2c] sm:$0x1] %vm197, %v187
    %199 = vst.msk [vmem:[%s4 + $0x94] sm:$0x1] %vm197, %v194
    %v200 = vlaneseq
    %v201 = vshrl.u32 %v200, 7
    %v202 = vsub.s32 0, %v201
    %v203 = vrot.slane %v187, %v202
    %v204 = vlaneseq
    %v205 = vshrl.u32 %v204, 7
    %v206 = vsub.s32 0, %v205
    %v207 = vrot.slane %v194, %v206
    %208 = vrot.lane.b32.xlu0 %v203, 64
    %v209 = vpop.permute.xlu0 %208
    %210 = vrot.lane.b32.xlu0 %v207, 64
    %v211 = vpop.permute.xlu0 %210
    %214 = vst.msk [vmem:[%s4 + $0x2d] sm:$0x1] %vm197, %v209
    %215 = vst.msk [vmem:[%s4 + $0x95] sm:$0x1] %vm197, %v211
    %v218 = vunpack.c.l.s4 1966171168
    %v219 = vunpack.c.0.s8 %v218
    %v220 = vlaneseq
    %v221 = vshrl.u32 %v220, 7
    %v222 = vsub.s32 %v219, %v221
    %v223 = vrot.slane %v135, %v222
    %v224 = vcombine.high %v223, %v223
    %v226 = vunpack.c.l.s4 1966171168
    %v227 = vunpack.c.0.s8 %v226
    %v228 = vlaneseq
    %v229 = vshrl.u32 %v228, 7
    %v230 = vsub.s32 %v227, %v229
    %v231 = vrot.slane %v223, %v230
    %v233 = vunpack.c.l.s4 1966171168
    %v234 = vunpack.c.0.s8 %v233
    %v235 = vlaneseq
    %v236 = vshrl.u32 %v235, 7
    %v237 = vsub.s32 %v234, %v236
    %v238 = vrot.slane %v224, %v237
    %241 = vst.msk [vmem:[%s4 + $0x36] sm:$0x1] %vm197, %v231
    %242 = vst.msk [vmem:[%s4 + $0x9e] sm:$0x1] %vm197, %v238
    %v243 = vlaneseq
    %v244 = vshrl.u32 %v243, 7
    %v245 = vsub.s32 0, %v244
    %v246 = vrot.slane %v231, %v245
    %v247 = vlaneseq
    %v248 = vshrl.u32 %v247, 7
    %v249 = vsub.s32 0, %v248
    %v250 = vrot.slane %v238, %v249
    %251 = vrot.lane.b32.xlu0 %v246, 64
    %v252 = vpop.permute.xlu0 %251
    %253 = vrot.lane.b32.xlu0 %v250, 64
    %v254 = vpop.permute.xlu0 %253
    %257 = vst.msk [vmem:[%s4 + $0x37] sm:$0x1] %vm197, %v252
    %258 = vst.msk [vmem:[%s4 + $0x9f] sm:$0x1] %vm197, %v254
    // Predicated region
    $region26: #{tpu_custom_call.1} parent=1 // pred_check
      _
    $region27: #{tpu_custom_call.1} parent=1 // pred_check_branch
      %260 = sbr.rel (0) target = $region29
    $region28: #{tpu_custom_call.1} parent=1 // pred_region
      _
    $region29: #{tpu_custom_call.1} parent=1 // pred_fallthru
      _
    // Predicated region
    $region30: #{tpu_custom_call.1} parent=1 // pred_check
      _
    $region31: #{tpu_custom_call.1} parent=1 // pred_check_branch
      %262 = sbr.rel (0) target = $region33
    $region32: #{tpu_custom_call.1} parent=1 // pred_region
      _
    $region33: #{tpu_custom_call.1} parent=1 // pred_fallthru
      _
    %263 = vsyncpa [#allocation3], 1
    %264 = vsyncpa [#allocation5], 1

</llo_original>
